<compile_context>
chip_gen: v7x
topology: tpu7x:2x2x1
jax: 0.10.0
libtpu: 0.0.40
codegen_flags: <defaults>
</compile_context>

<pallas_src>
import math
import functools
import operator

import jax
import jax.numpy as jnp
from jax.experimental import pallas as pl
from jax.experimental.pallas import tpu as pltpu


def block2x2_kernel(w_ref, x_ref, o_ref):
    # w_ref: (1, 2, size)   -- row 0 = [A | D] (diag term), row 1 = [B | C]
    # x_ref: (1, Bt, size)  -- lane-dense batch tile
    # o_ref: (1, Bt, size)
    size = x_ref.shape[-1]
    half = size // 2

    w_diag = w_ref[0, 0:1, :]      # (1, size), broadcast over sublanes (hoisted once)
    w_off = w_ref[0, 1:2, :]       # (1, size)

    x = x_ref[0, :, :]             # (Bt, size) full-width load
    # Swap the two halves of the lane axis (equivalent to a lane roll by half).
    x_sw = jnp.concatenate([x[:, half:], x[:, :half]], axis=-1)

    # out[:, :half] = A*x1 + B*x2 ; out[:, half:] = C*x1 + D*x2
    o_ref[0, :, :] = (w_diag * x + w_off * x_sw).astype(o_ref.dtype)


def block2x2diag_forward(x, ABCD):
    """x: (stack, ..., size), ABCD: (stack, 2, 2, size//2). Returns same shape as x."""
    stack = x.shape[0]
    size = x.shape[-1]
    assert size % 2 == 0
    batch_dims = x.shape[1:-1]
    B = functools.reduce(operator.mul, batch_dims, 1)

    # Repack weights into two full-width (lane-dense) rows per stack:
    #   w[:, 0, :] = [A | D]   (multiplies x in place)
    #   w[:, 1, :] = [B | C]   (multiplies the half-swapped x)
    A = ABCD[:, 0, 0, :]
    Bm = ABCD[:, 0, 1, :]
    C = ABCD[:, 1, 0, :]
    D = ABCD[:, 1, 1, :]
    w = jnp.stack(
        [jnp.concatenate([A, D], axis=-1),
         jnp.concatenate([Bm, C], axis=-1)],
        axis=1)                                        # (stack, 2, size)

    xr = x.reshape(stack, B, size)                     # lane-dense, free reshape

    itemsize = jnp.dtype(x.dtype).itemsize
    sub = 8 * max(1, 4 // itemsize)                    # sublane packing multiple
    # ~1 MiB per x tile -> double-buffered in+out tiles stay far below scoped VMEM
    # limits on every generation (incl. v7x's 64 MiB VMEM).
    target_rows = max(sub, (1 << 20) // max(1, size * itemsize))
    target_rows = (target_rows // sub) * sub
    bt = min(target_rows, ((B + sub - 1) // sub) * sub)
    bp = ((B + bt - 1) // bt) * bt                     # pad batch to a tile multiple
    if bp != B:
        xr = jnp.pad(xr, ((0, 0), (0, bp - B), (0, 0)))

    grid = (stack, bp // bt)
    out = pl.pallas_call(
        block2x2_kernel,
        out_shape=jax.ShapeDtypeStruct((stack, bp, size), x.dtype),
        grid=grid,
        in_specs=[
            # weights: resident across the batch-tile axis (same block for all b)
            pl.BlockSpec((1, 2, size), lambda s, b: (s, 0, 0)),
            pl.BlockSpec((1, bt, size), lambda s, b: (s, b, 0)),
        ],
        out_specs=pl.BlockSpec((1, bt, size), lambda s, b: (s, b, 0)),
        compiler_params=pltpu.CompilerParams(
            dimension_semantics=("parallel", "parallel")),
    )(w, xr)

    if bp != B:
        out = out[:, :B, :]
    return out.reshape(x.shape)


def block2x2diag_reference(x, ABCD):
    """Pure-JAX reference matching the PyTorch forward (real, tied_weight)."""
    stack = x.shape[0]
    size = x.shape[-1]
    half = size // 2
    xv = x.reshape(stack, -1, 1, 2, half)              # (stack, B, 1, 2, half)
    prod = ABCD[:, None] * xv                          # (stack, B, 2, 2, half)
    return prod.sum(axis=-2).reshape(x.shape)


if __name__ == "__main__":
    # Module config: size=32, stack=2, real, tied_weight=True, n_blocks=1.
    stack = 2
    size = 32
    batch = 8  # the "..." dims of the input

    key = jax.random.PRNGKey(0)
    k_abcd, k_x = jax.random.split(key)

    scaling = 1.0 / math.sqrt(2)
    ABCD = jax.random.normal(k_abcd, (stack, 2, 2, size // 2), jnp.float32) * scaling
    x = jax.random.normal(k_x, (stack, batch, size), jnp.float32)

    out = block2x2diag_forward(x, ABCD)
    out = jax.block_until_ready(out)

    ref = block2x2diag_reference(x, ABCD)
    assert out.shape == x.shape
    assert jnp.allclose(out, ref, atol=1e-5, rtol=1e-5), "mismatch vs reference"

    print("KERNEL_OK")
</pallas_src>

<mosaic_0001>
module attributes {stable_mosaic.version = 11 : i64} {
  func.func @block2x2_kernel(%arg0: i32, %arg1: i32, %arg2: memref<1x2x32xf32, #tpu.memory_space<vmem>>, %arg3: memref<1x8x32xf32, #tpu.memory_space<vmem>>, %arg4: memref<1x8x32xf32, #tpu.memory_space<vmem>>) attributes {dimension_semantics = [#tpu.dimension_semantics<parallel>, #tpu.dimension_semantics<parallel>], iteration_bounds = array<i64: 2, 1>, scalar_prefetch = 0 : i64, scratch_operands = 0 : i64, tpu.core_type = #tpu.core_type<tc>, window_params = [{transform_indices = @transform_0, window_bounds = array<i64: 1, 2, 32>}, {transform_indices = @transform_1, window_bounds = array<i64: 1, 8, 32>}, {transform_indices = @transform_2, window_bounds = array<i64: 1, 8, 32>}]} {
    %c0 = arith.constant 0 : index
    %c0_0 = arith.constant 0 : index
    %c0_1 = arith.constant 0 : index
    %0 = vector.load %arg2[%c0, %c0_0, %c0_1] : memref<1x2x32xf32, #tpu.memory_space<vmem>>, vector<1x1x32xf32>
    %1 = vector.shape_cast %0 : vector<1x1x32xf32> to vector<1x32xf32>
    %c0_2 = arith.constant 0 : index
    %c1 = arith.constant 1 : index
    %c0_3 = arith.constant 0 : index
    %2 = vector.load %arg2[%c0_2, %c1, %c0_3] : memref<1x2x32xf32, #tpu.memory_space<vmem>>, vector<1x1x32xf32>
    %3 = vector.shape_cast %2 : vector<1x1x32xf32> to vector<1x32xf32>
    %c0_4 = arith.constant 0 : index
    %c0_5 = arith.constant 0 : index
    %c0_6 = arith.constant 0 : index
    %4 = vector.load %arg3[%c0_4, %c0_5, %c0_6] : memref<1x8x32xf32, #tpu.memory_space<vmem>>, vector<1x8x32xf32>
    %5 = vector.shape_cast %4 : vector<1x8x32xf32> to vector<8x32xf32>
    %6 = vector.extract_strided_slice %5 {offsets = [0, 16], sizes = [8, 16], strides = [1, 1]} : vector<8x32xf32> to vector<8x16xf32>
    %7 = vector.extract_strided_slice %5 {offsets = [0, 0], sizes = [8, 16], strides = [1, 1]} : vector<8x32xf32> to vector<8x16xf32>
    %8 = tpu.concatenate %6, %7 in 1 : vector<8x16xf32>, vector<8x16xf32> -> vector<8x32xf32>
    %9 = vector.broadcast %1 : vector<1x32xf32> to vector<8x32xf32>
    %10 = arith.mulf %9, %5 : vector<8x32xf32>
    %11 = vector.broadcast %3 : vector<1x32xf32> to vector<8x32xf32>
    %12 = arith.mulf %11, %8 : vector<8x32xf32>
    %13 = arith.addf %10, %12 : vector<8x32xf32>
    %c0_7 = arith.constant 0 : index
    %c0_8 = arith.constant 0 : index
    %c0_9 = arith.constant 0 : index
    %14 = vector.load %arg4[%c0_7, %c0_8, %c0_9] : memref<1x8x32xf32, #tpu.memory_space<vmem>>, vector<1x8x32xf32>
    %15 = vector.shape_cast %14 : vector<1x8x32xf32> to vector<8x32xf32>
    %16 = vector.shape_cast %13 : vector<8x32xf32> to vector<1x8x32xf32>
    tpu.vector_store %arg4[%c0_7, %c0_8, %c0_9], %16 {strides = array<i32>} : memref<1x8x32xf32, #tpu.memory_space<vmem>>, vector<1x8x32xf32>,
    return
  }
  func.func @transform_0(%arg0: i32, %arg1: i32) -> (i32, i32, i32) {
    %c0_i32 = arith.constant 0 : i32
    %c0_i32_0 = arith.constant 0 : i32
    %c0_i32_1 = arith.constant 0 : i32
    return %arg0, %c0_i32, %c0_i32_0 : i32, i32, i32
  }
  func.func @transform_1(%arg0: i32, %arg1: i32) -> (i32, i32, i32) {
    %c0_i32 = arith.constant 0 : i32
    %c0_i32_0 = arith.constant 0 : i32
    return %arg0, %arg1, %c0_i32 : i32, i32, i32
  }
  func.func @transform_2(%arg0: i32, %arg1: i32) -> (i32, i32, i32) {
    %c0_i32 = arith.constant 0 : i32
    %c0_i32_0 = arith.constant 0 : i32
    return %arg0, %arg1, %c0_i32 : i32, i32, i32
  }
}

</mosaic_0001>

<llo_original>
// kernel: tpu_custom_call.1
$region0: #{tpu_custom_call.1}
  #allocation0 [shape = 'u32[]', space=smem, size = 0x4, offset = 0x4, fixed_abs, tag = 'smem constant byte address 0x4 - core index']
  #allocation1 [shape = 'u32[144,128]{1,0:T(1,128)}', space=vmem, size = 0x12000, scoped, tag = 'internal scratch']
  %s0 = inlined_call_operand.hbm [shape: f32[2,2,32], index: 0, kind: input, shape index: {}]
  %s1 = inlined_call_operand.hbm [shape: f32[2,8,32], index: 1, kind: input, shape index: {}]
  %s2 = inlined_call_operand.hbm [shape: f32[2,8,32], index: 2, kind: output, shape index: {}]
  %s3 = sld [smem:[#allocation0]]
  $region49: #{tpu_custom_call.1} parent=0
    _
  %s5 = ssub.s32 1, %s3
  %s6 = scalar_select 0, %s5, %s3
  $region1: #{tpu_custom_call.1} parent=0
    #allocation2 [shape = 'u8[2048]{0}', space=vmem, size = 0x800, scoped, tag = 'input window, operand 0']
    #allocation3 [shape = 's32[2]{0}', space=sflag, size = 0x8, scoped, tag = 'scoped memory for tpu_custom_call.1']
    #allocation4 [shape = 's32[2]{0}', space=sflag, size = 0x8, scoped, tag = 'scoped memory for tpu_custom_call.1']
    #allocation5 [shape = 'u8[8192]{0}', space=vmem, size = 0x2000, scoped, tag = 'input window, operand 1']
    #allocation6 [shape = 's32[2]{0}', space=sflag, size = 0x8, scoped, tag = 'scoped memory for tpu_custom_call.1']
    #allocation7 [shape = 'u8[8192]{0}', space=vmem, size = 0x2000, scoped, tag = 'output window, operand 0']
    %7 = vsyncpa [#allocation3], 0
    %s8 = scalar_lea.sflag [#allocation3], 1
    %9 = vsyncpa %s8, 0
    %10 = vsyncpa [#allocation6], 0
    %s11 = scalar_lea.sflag [#allocation6], 1
    %12 = vsyncpa %s11, 0
    %13 = vsyncpa [#allocation4], 0
    %s14 = scalar_lea.sflag [#allocation4], 1
    %15 = vsyncpa %s14, 0
    loop: start=0, step=1, limit=4
    $region2: #{tpu_custom_call.1} parent=1 // loop_pre_header
      _
    $region3: #{tpu_custom_call.1} parent=1 // loop_header
      %s17 = sphi 0, %s21
      %p18 = scmp.ge.s32.totalorder %s17, 4
      %s24 = sphi 0, %s36
      %s25 = sphi 0, %s32
      %s26 = sphi 0, %s24
      %s27 = sphi 0, %s25
      %s28 = sphi 0, %s26
      %s29 = sphi 0, %s27
      %s39 = sphi 0, %s41
      %s42 = sphi 0, %s39
      %s43 = sphi 0, %s42
      %s59 = sphi 0, %s43
      %s67 = sphi 0, %s69
      %s70 = sphi 0, %s67
      %s71 = sphi 0, %s70
      %s87 = sphi 0, %s71
      %s95 = sphi 0, %s97
      %s98 = sphi 0, %s95
      %s99 = sphi 0, %s98
      %s115 = sphi 0, %s99
    $region4: #{tpu_custom_call.1} parent=1 // loop_header_branch
      %20 = sbr.rel (%p18) target = $region8
    $region5: #{tpu_custom_call.1} parent=1 // loop_body
      %s22 = ssub.s32 %s17, 1
      %s23 = ssub.s32 %s17, 2
      %s30 = sadd.s32 1, %s25
      %p31 = scmp.ge.s32.totalorder %s30, 1
      %s32 = scalar_select %p31, 0, %s30
      %s33 = sadd.s32 1, %s24
      %s34 = scalar_select %p31, %s33, %s24
      %p35 = scmp.ge.s32.totalorder %s34, 2
      %s36 = scalar_select %p35, 0, %s34
      %s37 = ssub.s32 %s24, %s36
      %p38 = scmp.eq.s32.totalorder %s37, 0
      %s40 = sadd.s32 %s39, 1
      %s41 = scalar_select %p38, %s39, %s40
      %p44 = pneg %p38
      %p45 = scmp.eq.s32.totalorder %s17, 1
      %p46 = por %p44, %p45
      %p47 = scmp.ne.s32.totalorder %s39, %s42
      %p48 = scmp.eq.s32.totalorder %s17, 0
      %p49 = por %p47, %p48
      %p50 = scmp.ne.s32.totalorder %s39, %s42
      %p51 = scmp.eq.s32.totalorder %s22, 1
      %p52 = por %p50, %p51
      %p53 = scmp.ne.s32.totalorder %s42, %s43
      %p54 = scmp.eq.s32.totalorder %s22, 0
      %p55 = por %p53, %p54
      %p56 = scmp.ne.s32.totalorder %s42, %s43
      %p57 = scmp.eq.s32.totalorder %s23, 1
      %p58 = por %p56, %p57
      %p60 = scmp.ne.s32.totalorder %s43, %s59
      %p61 = scmp.eq.s32.totalorder %s23, 0
      %p62 = por %p60, %p61
      %s63 = ssub.s32 %s24, %s36
      %s64 = ssub.s32 %s25, %s32
      %s65 = sor.u32 %s63, %s64
      %p66 = scmp.eq.s32.totalorder %s65, 0
      %s68 = sadd.s32 %s67, 1
      %s69 = scalar_select %p66, %s67, %s68
      %p72 = pneg %p66
      %p73 = scmp.eq.s32.totalorder %s17, 1
      %p74 = por %p72, %p73
      %p75 = scmp.ne.s32.totalorder %s67, %s70
      %p76 = scmp.eq.s32.totalorder %s17, 0
      %p77 = por %p75, %p76
      %p78 = scmp.ne.s32.totalorder %s67, %s70
      %p79 = scmp.eq.s32.totalorder %s22, 1
      %p80 = por %p78, %p79
      %p81 = scmp.ne.s32.totalorder %s70, %s71
      %p82 = scmp.eq.s32.totalorder %s22, 0
      %p83 = por %p81, %p82
      %p84 = scmp.ne.s32.totalorder %s70, %s71
      %p85 = scmp.eq.s32.totalorder %s23, 1
      %p86 = por %p84, %p85
      %p88 = scmp.ne.s32.totalorder %s71, %s87
      %p89 = scmp.eq.s32.totalorder %s23, 0
      %p90 = por %p88, %p89
      %s91 = ssub.s32 %s24, %s36
      %s92 = ssub.s32 %s25, %s32
      %s93 = sor.u32 %s91, %s92
      %p94 = scmp.eq.s32.totalorder %s93, 0
      %s96 = sadd.s32 %s95, 1
      %s97 = scalar_select %p94, %s95, %s96
      %p100 = pneg %p94
      %p101 = scmp.eq.s32.totalorder %s17, 1
      %p102 = por %p100, %p101
      %p103 = scmp.ne.s32.totalorder %s95, %s98
      %p104 = scmp.eq.s32.totalorder %s17, 0
      %p105 = por %p103, %p104
      %p106 = scmp.ne.s32.totalorder %s95, %s98
      %p107 = scmp.eq.s32.totalorder %s22, 1
      %p108 = por %p106, %p107
      %p109 = scmp.ne.s32.totalorder %s98, %s99
      %p110 = scmp.eq.s32.totalorder %s22, 0
      %p111 = por %p109, %p110
      %p112 = scmp.ne.s32.totalorder %s98, %s99
      %p113 = scmp.eq.s32.totalorder %s23, 1
      %p114 = por %p112, %p113
      %p116 = scmp.ne.s32.totalorder %s99, %s115
      %p117 = scmp.eq.s32.totalorder %s23, 0
      %p118 = por %p116, %p117
      %p119 = scmp.le.s32.totalorder 1, %s17
      %p120 = scmp.lt.s32.totalorder %s17, 3
      %p121 = pnand %p119, %p120
      %p122 = pneg %p121
      // Predicated region
      $region9: #{tpu_custom_call.1} parent=5 // pred_check
        _
      $region10: #{tpu_custom_call.1} parent=5 // pred_check_branch
        %124 = sbr.rel (%p121) target = $region12
      $region11: #{tpu_custom_call.1} parent=5 // pred_region
        %s125 = ssub.s32 %s17, 1
      $region12: #{tpu_custom_call.1} parent=5 // pred_fallthru
        _
      %p126 = scmp.lt.s32.totalorder %s17, 2
      // Predicated region
      $region13: #{tpu_custom_call.1} parent=5 // pred_check
        %p127 = pneg %p126
      $region14: #{tpu_custom_call.1} parent=5 // pred_check_branch
        %129 = sbr.rel (%p127) target = $region16
      $region15: #{tpu_custom_call.1} parent=5 // pred_region
        // Predicated region
        $region17: #{tpu_custom_call.1} parent=15 // pred_check
          %p130 = pneg %p49
        $region18: #{tpu_custom_call.1} parent=15 // pred_check_branch
          %132 = sbr.rel (%p130) target = $region20
        $region19: #{tpu_custom_call.1} parent=15 // pred_region
          %s133 = sand.u32 %s39, 1
          %s134 = scalar_lea.sflag [#allocation3], %s133
          %s135 = sand.u32 %s39, 1
          %s136 = smul.addr %s135, 2
          %s137 = scalar_lea.vmem [#allocation2], %s136
          %s139 = ssub.s32 32, 32
          %140 = vsyncadd %s134, %s139
          %s141 = smul.addr %s24, 32
          %s142 = scalar_lea.hbm %s0, %s141
          %s144 = sshll.u32 %s137, 4
          %s145 = int_to_ptr.vmem [resolvable:$true] %s144
          %147 = dma.hbm_to_vmem [thread:$0]  %s142, 32, %s145, %s134
        $region20: #{tpu_custom_call.1} parent=15 // pred_fallthru
          _
        // Predicated region
        $region21: #{tpu_custom_call.1} parent=15 // pred_check
          %p148 = pneg %p77
        $region22: #{tpu_custom_call.1} parent=15 // pred_check_branch
          %150 = sbr.rel (%p148) target = $region24
        $region23: #{tpu_custom_call.1} parent=15 // pred_region
          %s151 = sand.u32 %s67, 1
          %s152 = scalar_lea.sflag [#allocation6], %s151
          %s153 = sand.u32 %s67, 1
          %s154 = smul.addr %s153, 8
          %s155 = scalar_lea.vmem [#allocation5], %s154
          %s157 = ssub.s32 128, 128
          %158 = vsyncadd %s152, %s157
          %s159 = sadd.s32 %s25, %s24
          %s160 = smul.addr %s159, 128
          %s161 = scalar_lea.hbm %s1, %s160
          %s163 = sshll.u32 %s155, 4
          %s164 = int_to_ptr.vmem [resolvable:$true] %s163
          %166 = dma.hbm_to_vmem [thread:$0]  %s161, 128, %s164, %s152
        $region24: #{tpu_custom_call.1} parent=15 // pred_fallthru
          _
      $region16: #{tpu_custom_call.1} parent=5 // pred_fallthru
        _
      %p167 = scmp.le.s32.totalorder 1, %s17
      %p168 = scmp.lt.s32.totalorder %s17, 3
      %p169 = pnand %p167, %p168
      %p170 = pneg %p169
      // Predicated region
      $region25: #{tpu_custom_call.1} parent=5 // pred_check
        _
      $region26: #{tpu_custom_call.1} parent=5 // pred_check_branch
        %172 = sbr.rel (%p169) target = $region28
      $region27: #{tpu_custom_call.1} parent=5 // pred_region
        %s173 = ssub.s32 %s17, 1
        %s174 = sand.u32 %s42, 1
        %s175 = scalar_lea.sflag [#allocation3], %s174
        %s176 = sand.u32 %s42, 1
        %s177 = smul.addr %s176, 2
        %s178 = scalar_lea.vmem [#allocation2], %s177
        // Predicated region
        $region29: #{tpu_custom_call.1} parent=27 // pred_check
          %p179 = pneg %p55
        $region30: #{tpu_custom_call.1} parent=27 // pred_check_branch
          %181 = sbr.rel (%p179) target = $region32
        $region31: #{tpu_custom_call.1} parent=27 // pred_region
          %182 = dma.done %s175, 32
        $region32: #{tpu_custom_call.1} parent=27 // pred_fallthru
          _
        %s183 = sand.u32 %s70, 1
        %s184 = scalar_lea.sflag [#allocation6], %s183
        %s185 = sand.u32 %s70, 1
        %s186 = smul.addr %s185, 8
        %s187 = scalar_lea.vmem [#allocation5], %s186
        // Predicated region
        $region33: #{tpu_custom_call.1} parent=27 // pred_check
          %p188 = pneg %p83
        $region34: #{tpu_custom_call.1} parent=27 // pred_check_branch
          %190 = sbr.rel (%p188) target = $region36
        $region35: #{tpu_custom_call.1} parent=27 // pred_region
          %191 = dma.done %s184, 128
        $region36: #{tpu_custom_call.1} parent=27 // pred_fallthru
          _
        %s192 = sand.u32 %s42, 1
        %s193 = scalar_lea.sflag [#allocation3], %s192
        %s194 = sand.u32 %s42, 1
        %s195 = smul.addr %s194, 2
        %s196 = scalar_lea.vmem [#allocation2], %s195
        %p197 = pneg %p55
        %p198 = pneg %p52
        %s199 = sand.u32 %s70, 1
        %s200 = scalar_lea.sflag [#allocation6], %s199
        %s201 = sand.u32 %s70, 1
        %s202 = smul.addr %s201, 8
        %s203 = scalar_lea.vmem [#allocation5], %s202
        %p204 = pneg %p83
        %p205 = pneg %p80
        %p206 = pneg %p111
        %p207 = pneg %p108
        %s208 = sand.u32 %s98, 1
        %s209 = scalar_lea.sflag [#allocation4], %s208
        %s210 = sand.u32 %s98, 1
        %s211 = smul.addr %s210, 8
        %s212 = scalar_lea.vmem [#allocation7], %s211
        %v213 = vld [vmem:[%s178] sm:$0x1]
        %v214 = vld [vmem:[%s178 + $0x1] sm:$0x1]
        %v215 = vld [vmem:[%s187] sm:$0xff]
        %217 = vrot.lane.b32.xlu0 %v215, 112
        %v218 = vpop.permute.xlu0 %217
        %220 = vrot.lane.b32.xlu0 %v215, 16
        %v221 = vpop.permute.xlu0 %220
        %vm223 = vcmask 130048
        %v224 = vsel %vm223, %v218, %v221
        %v225 = vlaneseq
        %v226 = vshrl.u32 %v225, 7
        %v227 = vsub.s32 0, %v226
        %v228 = vrot.slane %v213, %v227
        %v229 = vmul.f32 %v228, %v215
        %v230 = vlaneseq
        %v231 = vshrl.u32 %v230, 7
        %v232 = vsub.s32 0, %v231
        %v233 = vrot.slane %v214, %v232
        %v234 = vmul.f32 %v233, %v224
        %v235 = vadd.f32 %v229, %v234
        %vm236 = vcmask 261120
        %237 = vst.msk [vmem:[%s212] sm:$0xff] %vm236, %v235
        %s238 = sand.u32 %s98, 1
        %s239 = scalar_lea.sflag [#allocation4], %s238
        %s240 = sand.u32 %s98, 1
        %s241 = smul.addr %s240, 8
        %s242 = scalar_lea.vmem [#allocation7], %s241
        // Predicated region
        $region37: #{tpu_custom_call.1} parent=27 // pred_check
          %p243 = pneg %p108
        $region38: #{tpu_custom_call.1} parent=27 // pred_check_branch
          %245 = sbr.rel (%p243) target = $region40
        $region39: #{tpu_custom_call.1} parent=27 // pred_region
          %s247 = ssub.s32 128, 128
          %248 = vsyncadd %s239, %s247
          %s249 = sadd.s32 %s27, %s26
          %s250 = smul.addr %s249, 128
          %s251 = scalar_lea.hbm %s2, %s250
          %s253 = sshll.u32 %s242, 4
          %s254 = int_to_ptr.vmem [resolvable:$true] %s253
          %256 = dma.vmem_to_hbm [thread:$0]  %s254, 128, %s251, %s239
        $region40: #{tpu_custom_call.1} parent=27 // pred_fallthru
          _
      $region28: #{tpu_custom_call.1} parent=5 // pred_fallthru
        _
      %p257 = scmp.le.s32.totalorder 2, %s17
      // Predicated region
      $region41: #{tpu_custom_call.1} parent=5 // pred_check
        %p258 = pneg %p257
      $region42: #{tpu_custom_call.1} parent=5 // pred_check_branch
        %260 = sbr.rel (%p258) target = $region44
      $region43: #{tpu_custom_call.1} parent=5 // pred_region
        %s261 = ssub.s32 %s17, 2
        // Predicated region
        $region45: #{tpu_custom_call.1} parent=43 // pred_check
          %p262 = pneg %p114
        $region46: #{tpu_custom_call.1} parent=43 // pred_check_branch
          %264 = sbr.rel (%p262) target = $region48
        $region47: #{tpu_custom_call.1} parent=43 // pred_region
          %s265 = sand.u32 %s99, 1
          %s266 = scalar_lea.sflag [#allocation4], %s265
          %s267 = sand.u32 %s99, 1
          %s268 = smul.addr %s267, 8
          %s269 = scalar_lea.vmem [#allocation7], %s268
          %270 = dma.done %s266, 128
        $region48: #{tpu_custom_call.1} parent=43 // pred_fallthru
          _
      $region44: #{tpu_custom_call.1} parent=5 // pred_fallthru
        _
    $region6: #{tpu_custom_call.1} parent=1 // loop_footer
      %s21 = sadd.s32 1, %s17
    $region7: #{tpu_custom_call.1} parent=1 // loop_footer_branch
      %16 = sbr.rel target = $region3
    $region8: #{tpu_custom_call.1} parent=1 // loop_exit
      _
    %271 = vsyncpa [#allocation3], 1
    %s272 = scalar_lea.sflag [#allocation3], 1
    %273 = vsyncpa %s272, 1
    %274 = vsyncpa [#allocation6], 1
    %s275 = scalar_lea.sflag [#allocation6], 1
    %276 = vsyncpa %s275, 1
    %277 = vsyncpa [#allocation4], 1
    %s278 = scalar_lea.sflag [#allocation4], 1
    %279 = vsyncpa %s278, 1

</llo_original>
